<compile_context>
chip_gen: v7x
topology: tpu7x:2x2x1
jax: 0.10.0
libtpu: 0.0.40
codegen_flags: <defaults>
</compile_context>

<pallas_src>
import functools

import jax
import jax.numpy as jnp
from jax.experimental import pallas as pl
from jax.experimental.pallas import tpu as pltpu


# Raise v5e's 16 MiB default scoped-VMEM limit; actual usage stays ~a few MiB
# per step so this is also safe on v7x (64 MiB physical per TC).
_VMEM_LIMIT_BYTES = 64 * 1024 * 1024


def _simam_fused_kernel(x_ref, o_ref, *, n, e_lambda):
    """x_ref: (tile_rows, hw); each row = one (b, c) channel over H*W."""
    # f32 compute kept for exact parity with the PyTorch reference; a bf16
    # elementwise path (v6e/v7x only) would halve vreg/VMEM pressure.
    x = x_ref[...].astype(jnp.float32)
    mu = jnp.mean(x, axis=-1, keepdims=True)            # (tile_rows, 1)
    d = (x - mu) ** 2
    s = jnp.sum(d, axis=-1, keepdims=True)              # (tile_rows, 1)
    # One reciprocal per row (column vector) instead of hw divides per row.
    # approx=True would push this onto the EUP for free, but the kernel is
    # HBM-bound either way, so keep the exact form for tight accuracy.
    inv = pl.reciprocal(4.0 * (s / n + e_lambda), approx=False)
    y = d * inv + 0.5
    o_ref[...] = (x * jax.nn.sigmoid(y)).astype(o_ref.dtype)


def _simam_stats_kernel(x_ref, sum_ref, sumsq_ref):
    """Pass 1 of the chunked path: per-row sum(x) and sum(x^2) over hw chunks."""
    @pl.when(pl.program_id(1) == 0)
    def _():
        sum_ref[...] = jnp.zeros_like(sum_ref)
        sumsq_ref[...] = jnp.zeros_like(sumsq_ref)

    x = x_ref[...].astype(jnp.float32)
    sum_ref[...] += jnp.sum(x, axis=-1, keepdims=True)
    sumsq_ref[...] += jnp.sum(x * x, axis=-1, keepdims=True)


def _simam_apply_kernel(x_ref, sum_ref, sumsq_ref, o_ref, *, hw, n, e_lambda):
    """Pass 2 of the chunked path: apply the sigmoid gating per hw chunk."""
    x = x_ref[...].astype(jnp.float32)
    sx = sum_ref[...]
    sxx = sumsq_ref[...]
    mu = sx / hw
    # sum((x - mu)^2) == sum(x^2) - sum(x) * mu   (clamped vs f32 rounding)
    s = jnp.maximum(sxx - sx * mu, 0.0)
    inv = pl.reciprocal(4.0 * (s / n + e_lambda), approx=False)
    d = (x - mu) ** 2
    y = d * inv + 0.5
    o_ref[...] = (x * jax.nn.sigmoid(y)).astype(o_ref.dtype)


def _pick_tile_rows(rows, row_bytes_f32, target_block_bytes, max_tile_rows=1024):
    tr = max(1, target_block_bytes // max(row_bytes_f32, 1))
    tr = max(8, min((tr // 8) * 8, max_tile_rows))
    rows8 = ((rows + 7) // 8) * 8
    return max(8, min(tr, rows8))


def _chunked_tiles(rows, hw, target_block_bytes):
    """Pick (tile_rows, tile_hw) for the chunked path; None if hw % 128 != 0."""
    if hw % 128 != 0:
        return None
    # Largest multiple-of-128 divisor of hw that still leaves room for >=8 rows.
    max_cols = max(128, (target_block_bytes // (8 * 4)) // 128 * 128)
    tile_hw = None
    for k in range(1, hw // 128 + 1):
        cols = 128 * k
        if cols > max_cols:
            break
        if hw % cols == 0:
            tile_hw = cols
    if tile_hw is None:
        return None
    tile_rows = max(8, (target_block_bytes // (tile_hw * 4)) // 8 * 8)
    rows8 = ((rows + 7) // 8) * 8
    tile_rows = max(8, min(tile_rows, rows8, 1024))
    return tile_rows, tile_hw


def _simam_fused(x2d, rows, hw, n, e_lambda, target_block_bytes, row_bytes_f32):
    tile_rows = _pick_tile_rows(rows, row_bytes_f32, target_block_bytes)
    padded_rows = pl.cdiv(rows, tile_rows) * tile_rows
    if padded_rows != rows:
        x2d = jnp.pad(x2d, ((0, padded_rows - rows), (0, 0)))
    kernel = functools.partial(_simam_fused_kernel, n=n, e_lambda=e_lambda)
    return pl.pallas_call(
        kernel,
        out_shape=jax.ShapeDtypeStruct((padded_rows, hw), x2d.dtype),
        grid_spec=pltpu.PrefetchScalarGridSpec(
            num_scalar_prefetch=0,
            grid=(padded_rows // tile_rows,),
            in_specs=[pl.BlockSpec((tile_rows, hw), lambda i: (i, 0))],
            out_specs=pl.BlockSpec((tile_rows, hw), lambda i: (i, 0)),
        ),
        compiler_params=pltpu.CompilerParams(
            dimension_semantics=("parallel",),
            vmem_limit_bytes=_VMEM_LIMIT_BYTES,
        ),
    )(x2d)


def _simam_chunked(x2d, rows, hw, n, e_lambda, tile_rows, tile_hw):
    padded_rows = pl.cdiv(rows, tile_rows) * tile_rows
    if padded_rows != rows:
        x2d = jnp.pad(x2d, ((0, padded_rows - rows), (0, 0)))
    row_tiles = padded_rows // tile_rows
    hw_tiles = hw // tile_hw

    # Pass 1: per-row sum(x) and sum(x^2), accumulated across hw chunks.
    sums, sumsqs = pl.pallas_call(
        _simam_stats_kernel,
        out_shape=(jax.ShapeDtypeStruct((padded_rows, 1), jnp.float32),
                   jax.ShapeDtypeStruct((padded_rows, 1), jnp.float32)),
        grid_spec=pltpu.PrefetchScalarGridSpec(
            num_scalar_prefetch=0,
            grid=(row_tiles, hw_tiles),
            in_specs=[pl.BlockSpec((tile_rows, tile_hw), lambda i, j: (i, j))],
            out_specs=[pl.BlockSpec((tile_rows, 1), lambda i, j: (i, 0)),
                       pl.BlockSpec((tile_rows, 1), lambda i, j: (i, 0))],
        ),
        compiler_params=pltpu.CompilerParams(
            dimension_semantics=("parallel", "arbitrary"),
            vmem_limit_bytes=_VMEM_LIMIT_BYTES,
        ),
    )(x2d)

    # Pass 2: apply the gating, lane-dense blocks over the hw chunks.
    kernel = functools.partial(_simam_apply_kernel, hw=float(hw), n=n,
                               e_lambda=e_lambda)
    return pl.pallas_call(
        kernel,
        out_shape=jax.ShapeDtypeStruct((padded_rows, hw), x2d.dtype),
        grid_spec=pltpu.PrefetchScalarGridSpec(
            num_scalar_prefetch=0,
            grid=(row_tiles, hw_tiles),
            in_specs=[pl.BlockSpec((tile_rows, tile_hw), lambda i, j: (i, j)),
                      pl.BlockSpec((tile_rows, 1), lambda i, j: (i, 0)),
                      pl.BlockSpec((tile_rows, 1), lambda i, j: (i, 0))],
            out_specs=pl.BlockSpec((tile_rows, tile_hw), lambda i, j: (i, j)),
        ),
        compiler_params=pltpu.CompilerParams(
            dimension_semantics=("parallel", "arbitrary"),
            vmem_limit_bytes=_VMEM_LIMIT_BYTES,
        ),
    )(x2d, sums, sumsqs)


def simam(x, e_lambda=1e-4, *, target_block_bytes=2 * 1024 * 1024,
          force_chunked=False):
    """SimAM forward pass.  x: (B, C, H, W).  Requires H*W > 1 (as in PyTorch)."""
    b, c, h, w = x.shape
    hw = h * w
    rows = b * c
    n = float(hw - 1)
    x2d = x.reshape(rows, hw)
    row_bytes_f32 = hw * 4

    use_chunked = force_chunked or (8 * row_bytes_f32 > target_block_bytes)
    tiles = _chunked_tiles(rows, hw, target_block_bytes) if use_chunked else None
    if tiles is None:
        use_chunked = False

    if use_chunked:
        out2d = _simam_chunked(x2d, rows, hw, n, e_lambda, *tiles)
    else:
        out2d = _simam_fused(x2d, rows, hw, n, e_lambda, target_block_bytes,
                             row_bytes_f32)
    return out2d[:rows].reshape(b, c, h, w)


def _simam_ref(x, e_lambda=1e-4):
    """Pure-JAX reference mirroring the PyTorch forward."""
    b, c, h, w = x.shape
    n = w * h - 1
    mu = jnp.mean(x, axis=(2, 3), keepdims=True)
    d = (x - mu) ** 2
    s = jnp.sum(d, axis=(2, 3), keepdims=True)
    y = d / (4.0 * (s / n + e_lambda)) + 0.5
    return x * jax.nn.sigmoid(y)


if __name__ == "__main__":
    key = jax.random.PRNGKey(0)
    x = jax.random.normal(key, (2, 4, 16, 16), dtype=jnp.float32)
    ref = _simam_ref(x, e_lambda=1e-4)

    # Fused single-pass path (what small/medium feature maps use).
    out = jax.block_until_ready(simam(x, e_lambda=1e-4))
    assert out.shape == x.shape
    assert jnp.allclose(out, ref, atol=1e-5, rtol=1e-5)

    # Chunked two-pass path (used for very large H*W); forced here with a tiny
    # block budget so the hw-chunk accumulation is exercised at small shapes.
    out_c = jax.block_until_ready(
        simam(x, e_lambda=1e-4, force_chunked=True,
              target_block_bytes=8 * 128 * 4))
    assert out_c.shape == x.shape
    assert jnp.allclose(out_c, ref, atol=1e-4, rtol=1e-4)

    print("KERNEL_OK")
</pallas_src>

<mosaic_0001>
module attributes {stable_mosaic.version = 11 : i64} {
  func.func @_simam_fused_kernel(%arg0: i32, %arg1: memref<8x256xf32, #tpu.memory_space<vmem>>, %arg2: memref<8x256xf32, #tpu.memory_space<vmem>>) attributes {dimension_semantics = [#tpu.dimension_semantics<parallel>], iteration_bounds = array<i64: 1>, scalar_prefetch = 0 : i64, scratch_operands = 0 : i64, tpu.core_type = #tpu.core_type<tc>, window_params = [{transform_indices = @transform_0, window_bounds = array<i64: 8, 256>}, {transform_indices = @transform_1, window_bounds = array<i64: 8, 256>}]} {
    %c0 = arith.constant 0 : index
    %c0_0 = arith.constant 0 : index
    %0 = vector.load %arg1[%c0, %c0_0] : memref<8x256xf32, #tpu.memory_space<vmem>>, vector<8x256xf32>
    %cst = arith.constant dense<0.000000e+00> : vector<8xf32>
    %1 = vector.multi_reduction <add>, %0, %cst [1] : vector<8x256xf32> to vector<8xf32>
    %2 = vector.shape_cast %1 : vector<8xf32> to vector<8x1xf32>
    %cst_1 = arith.constant 2.560000e+02 : f32
    %3 = vector.broadcast %cst_1 : f32 to vector<8x1xf32>
    %4 = arith.divf %2, %3 : vector<8x1xf32>
    %5 = vector.broadcast %4 : vector<8x1xf32> to vector<8x256xf32>
    %6 = arith.subf %0, %5 : vector<8x256xf32>
    %7 = arith.mulf %6, %6 : vector<8x256xf32>
    %cst_2 = arith.constant dense<0.000000e+00> : vector<8xf32>
    %8 = vector.multi_reduction <add>, %7, %cst_2 [1] : vector<8x256xf32> to vector<8xf32>
    %9 = vector.shape_cast %8 : vector<8xf32> to vector<8x1xf32>
    %cst_3 = arith.constant 2.550000e+02 : f32
    %10 = vector.broadcast %cst_3 : f32 to vector<8x1xf32>
    %11 = arith.divf %9, %10 : vector<8x1xf32>
    %cst_4 = arith.constant 9.99999974E-5 : f32
    %12 = vector.broadcast %cst_4 : f32 to vector<8x1xf32>
    %13 = arith.addf %11, %12 : vector<8x1xf32>
    %cst_5 = arith.constant 4.000000e+00 : f32
    %14 = vector.broadcast %cst_5 : f32 to vector<8x1xf32>
    %15 = arith.mulf %14, %13 : vector<8x1xf32>
    %16 = tpu.reciprocal %15 : vector<8x1xf32> -> vector<8x1xf32>
    %17 = vector.broadcast %16 : vector<8x1xf32> to vector<8x256xf32>
    %18 = arith.mulf %7, %17 : vector<8x256xf32>
    %cst_6 = arith.constant 5.000000e-01 : f32
    %19 = vector.broadcast %cst_6 : f32 to vector<8x256xf32>
    %20 = arith.addf %18, %19 : vector<8x256xf32>
    %21 = arith.negf %20 : vector<8x256xf32>
    %22 = math.exp %21 : vector<8x256xf32>
    %cst_7 = arith.constant 1.000000e+00 : f32
    %23 = vector.broadcast %cst_7 : f32 to vector<8x256xf32>
    %24 = arith.addf %23, %22 : vector<8x256xf32>
    %25 = arith.divf %23, %24 : vector<8x256xf32>
    %26 = arith.mulf %0, %25 : vector<8x256xf32>
    %c0_8 = arith.constant 0 : index
    %c0_9 = arith.constant 0 : index
    %27 = vector.load %arg2[%c0_8, %c0_9] : memref<8x256xf32, #tpu.memory_space<vmem>>, vector<8x256xf32>
    tpu.vector_store %arg2[%c0_8, %c0_9], %26 {strides = array<i32>} : memref<8x256xf32, #tpu.memory_space<vmem>>, vector<8x256xf32>,
    return
  }
  func.func @transform_0(%arg0: i32) -> (i32, i32) {
    %c0_i32 = arith.constant 0 : i32
    %c0_i32_0 = arith.constant 0 : i32
    return %arg0, %c0_i32 : i32, i32
  }
  func.func @transform_1(%arg0: i32) -> (i32, i32) {
    %c0_i32 = arith.constant 0 : i32
    %c0_i32_0 = arith.constant 0 : i32
    return %arg0, %c0_i32 : i32, i32
  }
}

</mosaic_0001>

<llo_original>
// kernel: tpu_custom_call.1
$region0: #{tpu_custom_call.1}
  #allocation0 [shape = 'u32[]', space=smem, size = 0x4, offset = 0x4, fixed_abs, tag = 'smem constant byte address 0x4 - core index']
  #allocation1 [shape = 'u32[144,128]{1,0:T(1,128)}', space=vmem, size = 0x12000, scoped, tag = 'internal scratch']
  %s0 = inlined_call_operand.hbm [shape: f32[8,256], index: 0, kind: input, shape index: {}]
  %s1 = inlined_call_operand.hbm [shape: f32[8,256], index: 1, kind: output, shape index: {}]
  %s2 = sld [smem:[#allocation0]]
  $region18: #{tpu_custom_call.1} parent=0
    _
  %s4 = ssub.s32 1, %s2
  %s5 = scalar_select 0, %s4, %s2
  $region1: #{tpu_custom_call.1} parent=0
    #allocation2 [shape = 'u8[8192]{0}', space=vmem, size = 0x2000, scoped, tag = 'input window, operand 0, single buffered']
    #allocation3 [shape = 's32[1]{0}', space=sflag, size = 0x4, scoped, tag = 'scoped memory for tpu_custom_call.1']
    #allocation4 [shape = 's32[1]{0}', space=sflag, size = 0x4, scoped, tag = 'scoped memory for tpu_custom_call.1']
    #allocation5 [shape = 'u8[8192]{0}', space=vmem, size = 0x2000, scoped, tag = 'output window, operand 0, single buffered']
    %6 = vsyncpa [#allocation3], 0
    %7 = vsyncpa [#allocation4], 0
    // Predicated region
    $region2: #{tpu_custom_call.1} parent=1 // pred_check
      _
    $region3: #{tpu_custom_call.1} parent=1 // pred_check_branch
      %9 = sbr.rel (0) target = $region5
    $region4: #{tpu_custom_call.1} parent=1 // pred_region
      %s11 = ssub.s32 256, 256
      %12 = vsyncadd [#allocation3], %s11
      %s14 = sshll.u32 [#allocation2], 4
      %s15 = int_to_ptr.vmem [resolvable:$true] %s14
      %17 = dma.hbm_to_vmem [thread:$0]  %s0, 256, %s15, [#allocation3]
    $region5: #{tpu_custom_call.1} parent=1 // pred_fallthru
      _
    // Predicated region
    $region6: #{tpu_custom_call.1} parent=1 // pred_check
      _
    $region7: #{tpu_custom_call.1} parent=1 // pred_check_branch
      %19 = sbr.rel (0) target = $region9
    $region8: #{tpu_custom_call.1} parent=1 // pred_region
      %20 = dma.done [#allocation3], 256
    $region9: #{tpu_custom_call.1} parent=1 // pred_fallthru
      _
    %v21 = vld [vmem:[#allocation2] sm:$0xff]
    %v22 = vld [vmem:[#allocation2 + $0x8] sm:$0xff]
    %v23 = vadd.f32 %v21, %v22
    %24 = vadd.xlane.f32.xlu0 %v23
    %v25 = vpop.xlane.xlu0 %24
    %v26 = vrcp.pop 256.0
    %v27 = vmul.f32 %v25, %v26
    %v28 = vsub.f32 %v21, %v27
    %v29 = vsub.f32 %v22, %v27
    %v30 = vmul.f32 %v28, %v28
    %v31 = vmul.f32 %v29, %v29
    %v32 = vadd.f32 %v30, %v31
    %33 = vadd.xlane.f32.xlu0 %v32
    %v34 = vpop.xlane.xlu0 %33
    %v35 = vrcp.pop 255.0
    %v36 = vmul.f32 %v34, %v35
    %v37 = vadd.f32 %v36, 0.0001
    %v38 = vmul.f32 %v37, 4.0
    %v39 = vrcp.pop %v38
    %v40 = vmul.f32 %v30, %v39
    %v41 = vmul.f32 %v31, %v39
    %v42 = vadd.f32 %v40, 0.5
    %v43 = vadd.f32 %v41, 0.5
    %v44 = vxor.u32 %v42, 2147483648
    %v45 = vxor.u32 %v43, 2147483648
    %v46 = vmul.f32 %v44, 1.442695
    %v47 = vpow.pop %v46
    %v48 = vmul.f32 %v45, 1.442695
    %v49 = vpow.pop %v48
    %v50 = vadd.f32 %v47, 1.0
    %v51 = vadd.f32 %v49, 1.0
    %v52 = vrcp.pop %v50
    %v53 = vmul.f32 1.0, %v52
    %v54 = vrcp.pop %v51
    %v55 = vmul.f32 1.0, %v54
    %v56 = vmul.f32 %v21, %v53
    %v57 = vmul.f32 %v22, %v55
    %58 = vst [vmem:[#allocation5] sm:$0xff] %v56
    %59 = vst [vmem:[#allocation5 + $0x8] sm:$0xff] %v57
    // Predicated region
    $region10: #{tpu_custom_call.1} parent=1 // pred_check
      _
    $region11: #{tpu_custom_call.1} parent=1 // pred_check_branch
      %61 = sbr.rel (0) target = $region13
    $region12: #{tpu_custom_call.1} parent=1 // pred_region
      %s63 = ssub.s32 256, 256
      %64 = vsyncadd [#allocation4], %s63
      %s66 = sshll.u32 [#allocation5], 4
      %s67 = int_to_ptr.vmem [resolvable:$true] %s66
      %69 = dma.vmem_to_hbm [thread:$0]  %s67, 256, %s1, [#allocation4]
    $region13: #{tpu_custom_call.1} parent=1 // pred_fallthru
      _
    // Predicated region
    $region14: #{tpu_custom_call.1} parent=1 // pred_check
      _
    $region15: #{tpu_custom_call.1} parent=1 // pred_check_branch
      %71 = sbr.rel (0) target = $region17
    $region16: #{tpu_custom_call.1} parent=1 // pred_region
      %72 = dma.done [#allocation4], 256
    $region17: #{tpu_custom_call.1} parent=1 // pred_fallthru
      _
    %73 = vsyncpa [#allocation3], 1
    %74 = vsyncpa [#allocation4], 1

</llo_original>
